<compile_context>
chip_gen: v7x
topology: tpu7x:2x2x1
jax: 0.10.0
libtpu: 0.0.40
codegen_flags: <defaults>
</compile_context>

<pallas_src>
import math
from functools import partial

import jax
import jax.numpy as jnp
from jax.experimental import pallas as pl
from jax.experimental.pallas import tpu as pltpu

LANE = 128     # pad feature dims (last axis) to this (use 256 on v6e/v7x at scale)
SUBLANE = 16   # pad batch to this: bf16 dot-LHS sublane packing is (16,128)
MAX_TILE_M = 256


def _round_up(n, m):
    return ((n + m - 1) // m) * m


# ----------------------- fused Pallas kernel (all layers) --------------------

def _fused_mlp_kernel(x_ref, w_ref, b_ref, o_ref, *, num_layers):
    # x_ref : [TILE_M, Dmax]      f32 (zero-padded)
    # w_ref : [L, Dmax, Dmax]     bf16 (transposed to [Din, Dout], zero-padded)
    # b_ref : [L, 1, Dmax]        f32 (zero-padded)
    # o_ref : [TILE_M, Dmax]      f32
    h = x_ref[...]                                   # activation stays on-chip
    for i in range(num_layers):                      # static unroll
        # bf16 x bf16 MXU matmul with f32 accumulation.
        y = jnp.dot(h.astype(jnp.bfloat16), w_ref[i],
                    preferred_element_type=jnp.float32)
        y = y + b_ref[i]                             # [1, Dmax] sublane-broadcast add
        # Exact sigmoid via a single EUP transcendental: sigmoid(y) = 0.5*tanh(0.5*y)+0.5
        h = 0.5 * jnp.tanh(0.5 * y) + 0.5
    o_ref[...] = h.astype(o_ref.dtype)


def amldnn_symmetric_forward(w_all, b_all, x, nout):
    """Run the whole symmetric MLP in one fused Pallas call.

    w_all: [L, Dmax, Dmax] bf16 (transposed + zero-padded weights).
    b_all: [L, 1, Dmax]    f32  (zero-padded biases).
    x:     [B, nin]        f32.   Returns [B, nout] f32.
    """
    L, dmax_p, _ = w_all.shape
    B, nin = x.shape

    # Batch tile: whole (padded) batch for tiny B, otherwise 256-row tiles so a
    # "parallel" grid axis exists for v7x's second TensorCore.
    tile_m = min(_round_up(B, SUBLANE), MAX_TILE_M)
    Bp = _round_up(B, tile_m)

    # Zero-pad the input to (Bp, Dmax); padded lanes hit zero weight rows.
    x_p = jnp.zeros((Bp, dmax_p), jnp.float32).at[:B, :nin].set(x)

    out_p = pl.pallas_call(
        partial(_fused_mlp_kernel, num_layers=L),
        out_shape=jax.ShapeDtypeStruct((Bp, dmax_p), jnp.float32),
        grid=(Bp // tile_m,),
        in_specs=[
            pl.BlockSpec((tile_m, dmax_p), lambda i: (i, 0)),
            # Constant block index across the batch grid -> weights/biases stay
            # VMEM-resident, not re-DMA'd per batch tile.
            pl.BlockSpec((L, dmax_p, dmax_p), lambda i: (0, 0, 0)),
            pl.BlockSpec((L, 1, dmax_p), lambda i: (0, 0, 0)),
        ],
        out_specs=pl.BlockSpec((tile_m, dmax_p), lambda i: (i, 0)),
        compiler_params=pltpu.CompilerParams(
            dimension_semantics=("parallel",)),
    )(x_p, w_all, b_all)

    return out_p[:B, :nout]


# ----------------------------- Parameter setup -------------------------------

def build_layer_dims(nin, nout, num_layers, growth_rate):
    half = num_layers // 2
    frontN = [int(nin * growth_rate ** i) for i in range(half + 1)]
    backN = [int(nout * growth_rate ** (half - i)) for i in range(half + 1)]
    dims = []
    for i in range(half):                      # Densefront
        dims.append((frontN[i], frontN[i + 1]))
    dims.append((frontN[-1], backN[0]))        # Densemiddle
    for i in range(half):                      # Denseback
        dims.append((backN[i], backN[i + 1]))
    return dims


def init_params(key, nin, nout, num_layers, growth_rate):
    """PyTorch nn.Linear-style init: U[-1/sqrt(in), 1/sqrt(in)]. Layout (w:[out,in], b:[out])."""
    dims = build_layer_dims(nin, nout, num_layers, growth_rate)
    params = []
    for (din, dout) in dims:
        key, kw, kb = jax.random.split(key, 3)
        bound = 1.0 / math.sqrt(din)
        w = jax.random.uniform(kw, (dout, din), jnp.float32, -bound, bound)
        b = jax.random.uniform(kb, (dout,), jnp.float32, -bound, bound)
        params.append((w, b))
    return params


def prepare_params(params):
    """One-time packing: all layers into one bf16 weight tensor + one f32 bias tensor.

    Weights are transposed to [Din, Dout] and zero-padded to [Dmax, Dmax];
    padded rows/cols MUST remain exactly zero (padded-lane correctness relies
    on zero weight rows cancelling the sigmoid(0)=0.5 values in padded lanes).
    """
    L = len(params)
    dmax = max(max(w.shape) for (w, _) in params)
    dmax_p = _round_up(dmax, LANE)
    w_all = jnp.zeros((L, dmax_p, dmax_p), jnp.bfloat16)
    b_all = jnp.zeros((L, 1, dmax_p), jnp.float32)
    for i, (w, b) in enumerate(params):
        dout, din = w.shape
        w_all = w_all.at[i, :din, :dout].set(w.T.astype(jnp.bfloat16))
        b_all = b_all.at[i, 0, :dout].set(b)
    return w_all, b_all


# Pure-JAX f32 reference for correctness checking.
def amldnn_symmetric_ref(params, x):
    for (w, b) in params:
        x = jax.nn.sigmoid(x @ w.T + b)
    return x


# ----------------------------------- Main ------------------------------------

if __name__ == "__main__":
    nin, nout = 8, 8
    num_layers = 4
    growth_rate = 2
    batch = 4

    key = jax.random.PRNGKey(0)
    key, kx = jax.random.split(key)
    params = init_params(key, nin, nout, num_layers, growth_rate)
    w_all, b_all = prepare_params(params)      # pack / transpose / pad ONCE
    x = jax.random.normal(kx, (batch, nin), jnp.float32)

    fwd = jax.jit(amldnn_symmetric_forward, static_argnums=(3,))
    out = fwd(w_all, b_all, x, nout)
    out = jax.block_until_ready(out)

    ref = amldnn_symmetric_ref(params, x)
    assert out.shape == (batch, nout), out.shape
    # bf16 MXU inputs (f32 accumulation, exact tanh-based sigmoid): ~1e-3-level error.
    assert jnp.allclose(out, ref, atol=1e-2, rtol=1e-2), "mismatch vs reference"

    print("KERNEL_OK")
</pallas_src>

<mosaic_0001>
module attributes {stable_mosaic.version = 11 : i64} {
  func.func @_fused_mlp_kernel(%arg0: i32, %arg1: memref<16x128xf32, #tpu.memory_space<vmem>>, %arg2: memref<5x128x128xbf16, #tpu.memory_space<vmem>>, %arg3: memref<5x1x128xf32, #tpu.memory_space<vmem>>, %arg4: memref<16x128xf32, #tpu.memory_space<vmem>>) attributes {dimension_semantics = [#tpu.dimension_semantics<parallel>], iteration_bounds = array<i64: 1>, scalar_prefetch = 0 : i64, scratch_operands = 0 : i64, tpu.core_type = #tpu.core_type<tc>, window_params = [{transform_indices = @transform_0, window_bounds = array<i64: 16, 128>}, {pipeline_mode = #tpu.pipeline_mode<synchronous>, transform_indices = @transform_1, window_bounds = array<i64: 5, 128, 128>}, {pipeline_mode = #tpu.pipeline_mode<synchronous>, transform_indices = @transform_2, window_bounds = array<i64: 5, 1, 128>}, {transform_indices = @transform_3, window_bounds = array<i64: 16, 128>}]} {
    %c0 = arith.constant 0 : index
    %c0_0 = arith.constant 0 : index
    %0 = vector.load %arg1[%c0, %c0_0] : memref<16x128xf32, #tpu.memory_space<vmem>>, vector<16x128xf32>
    %1 = arith.truncf %0 : vector<16x128xf32> to vector<16x128xbf16>
    %c0_1 = arith.constant 0 : index
    %c0_2 = arith.constant 0 : index
    %c0_3 = arith.constant 0 : index
    %2 = vector.load %arg2[%c0_1, %c0_2, %c0_3] : memref<5x128x128xbf16, #tpu.memory_space<vmem>>, vector<1x128x128xbf16>
    %3 = vector.shape_cast %2 : vector<1x128x128xbf16> to vector<128x128xbf16>
    %cst = arith.constant dense<0.000000e+00> : vector<16x128xf32>
    %4 = tpu.matmul %1, %3, %cst {dimension_numbers = #tpu.dot_dimension_numbers<[1], [0], [0], [1], [0, 0, 1, 1], [], []>} : vector<16x128xbf16>, vector<128x128xbf16>, vector<16x128xf32> -> vector<16x128xf32>
    %c0_4 = arith.constant 0 : index
    %c0_5 = arith.constant 0 : index
    %c0_6 = arith.constant 0 : index
    %5 = vector.load %arg3[%c0_4, %c0_5, %c0_6] : memref<5x1x128xf32, #tpu.memory_space<vmem>>, vector<1x1x128xf32>
    %6 = vector.shape_cast %5 : vector<1x1x128xf32> to vector<1x128xf32>
    %7 = vector.broadcast %6 : vector<1x128xf32> to vector<16x128xf32>
    %8 = arith.addf %4, %7 : vector<16x128xf32>
    %cst_7 = arith.constant 5.000000e-01 : f32
    %9 = vector.broadcast %cst_7 : f32 to vector<16x128xf32>
    %10 = arith.mulf %9, %8 : vector<16x128xf32>
    %11 = math.tanh %10 : vector<16x128xf32>
    %cst_8 = arith.constant 5.000000e-01 : f32
    %12 = vector.broadcast %cst_8 : f32 to vector<16x128xf32>
    %13 = arith.mulf %12, %11 : vector<16x128xf32>
    %cst_9 = arith.constant 5.000000e-01 : f32
    %14 = vector.broadcast %cst_9 : f32 to vector<16x128xf32>
    %15 = arith.addf %13, %14 : vector<16x128xf32>
    %16 = arith.truncf %15 : vector<16x128xf32> to vector<16x128xbf16>
    %c1 = arith.constant 1 : index
    %c0_10 = arith.constant 0 : index
    %c0_11 = arith.constant 0 : index
    %17 = vector.load %arg2[%c1, %c0_10, %c0_11] : memref<5x128x128xbf16, #tpu.memory_space<vmem>>, vector<1x128x128xbf16>
    %18 = vector.shape_cast %17 : vector<1x128x128xbf16> to vector<128x128xbf16>
    %cst_12 = arith.constant dense<0.000000e+00> : vector<16x128xf32>
    %19 = tpu.matmul %16, %18, %cst_12 {dimension_numbers = #tpu.dot_dimension_numbers<[1], [0], [0], [1], [0, 0, 1, 1], [], []>} : vector<16x128xbf16>, vector<128x128xbf16>, vector<16x128xf32> -> vector<16x128xf32>
    %c1_13 = arith.constant 1 : index
    %c0_14 = arith.constant 0 : index
    %c0_15 = arith.constant 0 : index
    %20 = vector.load %arg3[%c1_13, %c0_14, %c0_15] : memref<5x1x128xf32, #tpu.memory_space<vmem>>, vector<1x1x128xf32>
    %21 = vector.shape_cast %20 : vector<1x1x128xf32> to vector<1x128xf32>
    %22 = vector.broadcast %21 : vector<1x128xf32> to vector<16x128xf32>
    %23 = arith.addf %19, %22 : vector<16x128xf32>
    %cst_16 = arith.constant 5.000000e-01 : f32
    %24 = vector.broadcast %cst_16 : f32 to vector<16x128xf32>
    %25 = arith.mulf %24, %23 : vector<16x128xf32>
    %26 = math.tanh %25 : vector<16x128xf32>
    %cst_17 = arith.constant 5.000000e-01 : f32
    %27 = vector.broadcast %cst_17 : f32 to vector<16x128xf32>
    %28 = arith.mulf %27, %26 : vector<16x128xf32>
    %cst_18 = arith.constant 5.000000e-01 : f32
    %29 = vector.broadcast %cst_18 : f32 to vector<16x128xf32>
    %30 = arith.addf %28, %29 : vector<16x128xf32>
    %31 = arith.truncf %30 : vector<16x128xf32> to vector<16x128xbf16>
    %c2 = arith.constant 2 : index
    %c0_19 = arith.constant 0 : index
    %c0_20 = arith.constant 0 : index
    %32 = vector.load %arg2[%c2, %c0_19, %c0_20] : memref<5x128x128xbf16, #tpu.memory_space<vmem>>, vector<1x128x128xbf16>
    %33 = vector.shape_cast %32 : vector<1x128x128xbf16> to vector<128x128xbf16>
    %cst_21 = arith.constant dense<0.000000e+00> : vector<16x128xf32>
    %34 = tpu.matmul %31, %33, %cst_21 {dimension_numbers = #tpu.dot_dimension_numbers<[1], [0], [0], [1], [0, 0, 1, 1], [], []>} : vector<16x128xbf16>, vector<128x128xbf16>, vector<16x128xf32> -> vector<16x128xf32>
    %c2_22 = arith.constant 2 : index
    %c0_23 = arith.constant 0 : index
    %c0_24 = arith.constant 0 : index
    %35 = vector.load %arg3[%c2_22, %c0_23, %c0_24] : memref<5x1x128xf32, #tpu.memory_space<vmem>>, vector<1x1x128xf32>
    %36 = vector.shape_cast %35 : vector<1x1x128xf32> to vector<1x128xf32>
    %37 = vector.broadcast %36 : vector<1x128xf32> to vector<16x128xf32>
    %38 = arith.addf %34, %37 : vector<16x128xf32>
    %cst_25 = arith.constant 5.000000e-01 : f32
    %39 = vector.broadcast %cst_25 : f32 to vector<16x128xf32>
    %40 = arith.mulf %39, %38 : vector<16x128xf32>
    %41 = math.tanh %40 : vector<16x128xf32>
    %cst_26 = arith.constant 5.000000e-01 : f32
    %42 = vector.broadcast %cst_26 : f32 to vector<16x128xf32>
    %43 = arith.mulf %42, %41 : vector<16x128xf32>
    %cst_27 = arith.constant 5.000000e-01 : f32
    %44 = vector.broadcast %cst_27 : f32 to vector<16x128xf32>
    %45 = arith.addf %43, %44 : vector<16x128xf32>
    %46 = arith.truncf %45 : vector<16x128xf32> to vector<16x128xbf16>
    %c3 = arith.constant 3 : index
    %c0_28 = arith.constant 0 : index
    %c0_29 = arith.constant 0 : index
    %47 = vector.load %arg2[%c3, %c0_28, %c0_29] : memref<5x128x128xbf16, #tpu.memory_space<vmem>>, vector<1x128x128xbf16>
    %48 = vector.shape_cast %47 : vector<1x128x128xbf16> to vector<128x128xbf16>
    %cst_30 = arith.constant dense<0.000000e+00> : vector<16x128xf32>
    %49 = tpu.matmul %46, %48, %cst_30 {dimension_numbers = #tpu.dot_dimension_numbers<[1], [0], [0], [1], [0, 0, 1, 1], [], []>} : vector<16x128xbf16>, vector<128x128xbf16>, vector<16x128xf32> -> vector<16x128xf32>
    %c3_31 = arith.constant 3 : index
    %c0_32 = arith.constant 0 : index
    %c0_33 = arith.constant 0 : index
    %50 = vector.load %arg3[%c3_31, %c0_32, %c0_33] : memref<5x1x128xf32, #tpu.memory_space<vmem>>, vector<1x1x128xf32>
    %51 = vector.shape_cast %50 : vector<1x1x128xf32> to vector<1x128xf32>
    %52 = vector.broadcast %51 : vector<1x128xf32> to vector<16x128xf32>
    %53 = arith.addf %49, %52 : vector<16x128xf32>
    %cst_34 = arith.constant 5.000000e-01 : f32
    %54 = vector.broadcast %cst_34 : f32 to vector<16x128xf32>
    %55 = arith.mulf %54, %53 : vector<16x128xf32>
    %56 = math.tanh %55 : vector<16x128xf32>
    %cst_35 = arith.constant 5.000000e-01 : f32
    %57 = vector.broadcast %cst_35 : f32 to vector<16x128xf32>
    %58 = arith.mulf %57, %56 : vector<16x128xf32>
    %cst_36 = arith.constant 5.000000e-01 : f32
    %59 = vector.broadcast %cst_36 : f32 to vector<16x128xf32>
    %60 = arith.addf %58, %59 : vector<16x128xf32>
    %61 = arith.truncf %60 : vector<16x128xf32> to vector<16x128xbf16>
    %c4 = arith.constant 4 : index
    %c0_37 = arith.constant 0 : index
    %c0_38 = arith.constant 0 : index
    %62 = vector.load %arg2[%c4, %c0_37, %c0_38] : memref<5x128x128xbf16, #tpu.memory_space<vmem>>, vector<1x128x128xbf16>
    %63 = vector.shape_cast %62 : vector<1x128x128xbf16> to vector<128x128xbf16>
    %cst_39 = arith.constant dense<0.000000e+00> : vector<16x128xf32>
    %64 = tpu.matmul %61, %63, %cst_39 {dimension_numbers = #tpu.dot_dimension_numbers<[1], [0], [0], [1], [0, 0, 1, 1], [], []>} : vector<16x128xbf16>, vector<128x128xbf16>, vector<16x128xf32> -> vector<16x128xf32>
    %c4_40 = arith.constant 4 : index
    %c0_41 = arith.constant 0 : index
    %c0_42 = arith.constant 0 : index
    %65 = vector.load %arg3[%c4_40, %c0_41, %c0_42] : memref<5x1x128xf32, #tpu.memory_space<vmem>>, vector<1x1x128xf32>
    %66 = vector.shape_cast %65 : vector<1x1x128xf32> to vector<1x128xf32>
    %67 = vector.broadcast %66 : vector<1x128xf32> to vector<16x128xf32>
    %68 = arith.addf %64, %67 : vector<16x128xf32>
    %cst_43 = arith.constant 5.000000e-01 : f32
    %69 = vector.broadcast %cst_43 : f32 to vector<16x128xf32>
    %70 = arith.mulf %69, %68 : vector<16x128xf32>
    %71 = math.tanh %70 : vector<16x128xf32>
    %cst_44 = arith.constant 5.000000e-01 : f32
    %72 = vector.broadcast %cst_44 : f32 to vector<16x128xf32>
    %73 = arith.mulf %72, %71 : vector<16x128xf32>
    %cst_45 = arith.constant 5.000000e-01 : f32
    %74 = vector.broadcast %cst_45 : f32 to vector<16x128xf32>
    %75 = arith.addf %73, %74 : vector<16x128xf32>
    %c0_46 = arith.constant 0 : index
    %c0_47 = arith.constant 0 : index
    %76 = vector.load %arg4[%c0_46, %c0_47] : memref<16x128xf32, #tpu.memory_space<vmem>>, vector<16x128xf32>
    tpu.vector_store %arg4[%c0_46, %c0_47], %75 {strides = array<i32>} : memref<16x128xf32, #tpu.memory_space<vmem>>, vector<16x128xf32>,
    return
  }
  func.func @transform_0(%arg0: i32) -> (i32, i32) {
    %c0_i32 = arith.constant 0 : i32
    %c0_i32_0 = arith.constant 0 : i32
    return %arg0, %c0_i32 : i32, i32
  }
  func.func @transform_1(%arg0: i32) -> (i32, i32, i32) {
    %c0_i32 = arith.constant 0 : i32
    %c0_i32_0 = arith.constant 0 : i32
    %c0_i32_1 = arith.constant 0 : i32
    %c0_i32_2 = arith.constant 0 : i32
    return %c0_i32, %c0_i32_0, %c0_i32_1 : i32, i32, i32
  }
  func.func @transform_2(%arg0: i32) -> (i32, i32, i32) {
    %c0_i32 = arith.constant 0 : i32
    %c0_i32_0 = arith.constant 0 : i32
    %c0_i32_1 = arith.constant 0 : i32
    %c0_i32_2 = arith.constant 0 : i32
    return %c0_i32, %c0_i32_0, %c0_i32_1 : i32, i32, i32
  }
  func.func @transform_3(%arg0: i32) -> (i32, i32) {
    %c0_i32 = arith.constant 0 : i32
    %c0_i32_0 = arith.constant 0 : i32
    return %arg0, %c0_i32 : i32, i32
  }
}

</mosaic_0001>

<llo_original>
// kernel: amldnn_symmetric_forward.1
$region0: #{amldnn_symmetric_forward.1}
  #allocation0 [shape = 'u32[]', space=smem, size = 0x4, offset = 0x4, fixed_abs, tag = 'smem constant byte address 0x4 - core index']
  #allocation1 [shape = 'u32[144,128]{1,0:T(1,128)}', space=vmem, size = 0x12000, scoped, tag = 'internal scratch']
  %s0 = inlined_call_operand.vmem [shape: f32[16,128], index: 0, kind: input, shape index: {}]
  %s1 = inlined_call_operand.hbm [shape: bf16[5,128,128], index: 1, kind: input, shape index: {}]
  %s2 = inlined_call_operand.vmem [shape: f32[5,1,128], index: 2, kind: input, shape index: {}]
  %s3 = inlined_call_operand.vmem [shape: f32[16,128], index: 3, kind: output, shape index: {}]
  %s4 = sld [smem:[#allocation0]]
  $region26: #{amldnn_symmetric_forward.1} parent=0
    _
  %s6 = ssub.s32 1, %s4
  %s7 = scalar_select 0, %s6, %s4
  $region1: #{amldnn_symmetric_forward.1} parent=0
    #allocation2 [shape = 'u8[163840]{0}', space=vmem, size = 0x28000, scoped, tag = 'input window, operand 1, single buffered']
    #allocation3 [shape = 's32[1]{0}', space=sflag, size = 0x4, scoped, tag = 'scoped memory for amldnn_symmetric_forward.1']
    %8 = vsyncpa [#allocation3], 0
    // Predicated region
    $region2: #{amldnn_symmetric_forward.1} parent=1 // pred_check
      _
    $region3: #{amldnn_symmetric_forward.1} parent=1 // pred_check_branch
      %10 = sbr.rel (0) target = $region5
    $region4: #{amldnn_symmetric_forward.1} parent=1 // pred_region
      _
    $region5: #{amldnn_symmetric_forward.1} parent=1 // pred_fallthru
      _
    // Predicated region
    $region6: #{amldnn_symmetric_forward.1} parent=1 // pred_check
      _
    $region7: #{amldnn_symmetric_forward.1} parent=1 // pred_check_branch
      %12 = sbr.rel (0) target = $region9
    $region8: #{amldnn_symmetric_forward.1} parent=1 // pred_region
      %s14 = ssub.s32 5120, 5120
      %15 = vsyncadd [#allocation3], %s14
      %s16 = sshll.u32 [#allocation2], 4
      %s17 = int_to_ptr.vmem [resolvable:$true] %s16
      %22 = dma.hbm_to_vmem [thread:$0]  %s1, 5120, %s17, [#allocation3], 64, 64, 4
    $region9: #{amldnn_symmetric_forward.1} parent=1 // pred_fallthru
      _
    // Predicated region
    $region10: #{amldnn_symmetric_forward.1} parent=1 // pred_check
      _
    $region11: #{amldnn_symmetric_forward.1} parent=1 // pred_check_branch
      %24 = sbr.rel (0) target = $region13
    $region12: #{amldnn_symmetric_forward.1} parent=1 // pred_region
      _
    $region13: #{amldnn_symmetric_forward.1} parent=1 // pred_fallthru
      _
    // Predicated region
    $region14: #{amldnn_symmetric_forward.1} parent=1 // pred_check
      _
    $region15: #{amldnn_symmetric_forward.1} parent=1 // pred_check_branch
      %26 = sbr.rel (0) target = $region17
    $region16: #{amldnn_symmetric_forward.1} parent=1 // pred_region
      %27 = dma.done [#allocation3], 5120
    $region17: #{amldnn_symmetric_forward.1} parent=1 // pred_fallthru
      _
    %v29 = vld [vmem:[%s0] sm:$0xff]
    %v30 = vld [vmem:[%s0 + $0x8] sm:$0xff]
    %v31 = vpack.c.bf16 %v30, %v29
    %v32 = vld [vmem:[#allocation2] sm:$0xf]
    %v33 = vld [vmem:[#allocation2 + $0x4] sm:$0xf]
    %v34 = vld [vmem:[#allocation2 + $0x8] sm:$0xf]
    %v35 = vld [vmem:[#allocation2 + $0xc] sm:$0xf]
    %v36 = vld [vmem:[#allocation2 + $0x10] sm:$0xf]
    %v37 = vld [vmem:[#allocation2 + $0x14] sm:$0xf]
    %v38 = vld [vmem:[#allocation2 + $0x18] sm:$0xf]
    %v39 = vld [vmem:[#allocation2 + $0x1c] sm:$0xf]
    %v40 = vld [vmem:[#allocation2 + $0x20] sm:$0xf]
    %v41 = vld [vmem:[#allocation2 + $0x24] sm:$0xf]
    %v42 = vld [vmem:[#allocation2 + $0x28] sm:$0xf]
    %v43 = vld [vmem:[#allocation2 + $0x2c] sm:$0xf]
    %v44 = vld [vmem:[#allocation2 + $0x30] sm:$0xf]
    %v45 = vld [vmem:[#allocation2 + $0x34] sm:$0xf]
    %v46 = vld [vmem:[#allocation2 + $0x38] sm:$0xf]
    %v47 = vld [vmem:[#allocation2 + $0x3c] sm:$0xf]
    %v48 = vld [vmem:[%s2] sm:$0x1]
    %v50 = vlaneseq
    %v51 = vshrl.u32 %v50, 7
    %v52 = vsub.s32 0, %v51
    %v53 = vrot.slane %v48, %v52
    %v71 = vunpack.c.l.b16 %v32
    %v72 = vunpack.c.l.b16 %v33
    %v73 = vunpack.c.l.b16 %v34
    %v74 = vunpack.c.l.b16 %v35
    %v75 = vunpack.c.l.b16 %v36
    %v76 = vunpack.c.l.b16 %v37
    %v77 = vunpack.c.l.b16 %v38
    %v78 = vunpack.c.l.b16 %v39
    %v79 = vunpack.c.l.b16 %v40
    %v80 = vunpack.c.l.b16 %v41
    %v81 = vunpack.c.l.b16 %v42
    %v82 = vunpack.c.l.b16 %v43
    %v83 = vunpack.c.l.b16 %v44
    %v84 = vunpack.c.l.b16 %v45
    %v85 = vunpack.c.l.b16 %v46
    %v86 = vunpack.c.l.b16 %v47
    %v87 = vpack.c.b16 %v72, %v71
    %v88 = vpack.c.b16 %v74, %v73
    %v89 = vpack.c.b16 %v76, %v75
    %v90 = vpack.c.b16 %v78, %v77
    %v91 = vpack.c.b16 %v80, %v79
    %v92 = vpack.c.b16 %v82, %v81
    %v93 = vpack.c.b16 %v84, %v83
    %v94 = vpack.c.b16 %v86, %v85
    %103 = vmatprep.subr.bf16.mxu0 0
    %104 = vmatpush1.bf16.msra.mxu0 %v87
    %105 = vmatprep.subr.bf16.mxu0 0
    %106 = vmatpush1.bf16.msra.mxu0 %v88
    %107 = vmatprep.subr.bf16.mxu0 0
    %108 = vmatpush1.bf16.msra.mxu0 %v89
    %109 = vmatprep.subr.bf16.mxu0 0
    %110 = vmatpush1.bf16.msra.mxu0 %v90
    %111 = vmatprep.subr.bf16.mxu0 0
    %112 = vmatpush1.bf16.msra.mxu0 %v91
    %113 = vmatprep.subr.bf16.mxu0 0
    %114 = vmatpush1.bf16.msra.mxu0 %v92
    %115 = vmatprep.subr.bf16.mxu0 0
    %116 = vmatpush1.bf16.msra.mxu0 %v93
    %117 = vmatprep.subr.bf16.mxu0 0
    %118 = vmatpush1.bf16.msra.mxu0 %v94
    %119 = vmatprep.subr.bf16.mxu0 0
    %120 = vmatpush1.bf16.msra.mxu0 0
    %121 = vmatprep.subr.bf16.mxu0 0
    %122 = vmatpush1.bf16.msra.mxu0 0
    %123 = vmatprep.subr.bf16.mxu0 0
    %124 = vmatpush1.bf16.msra.mxu0 0
    %125 = vmatprep.subr.bf16.mxu0 0
    %126 = vmatpush1.bf16.msra.mxu0 0
    %127 = vmatprep.subr.bf16.mxu0 0
    %128 = vmatpush1.bf16.msra.mxu0 0
    %129 = vmatprep.subr.bf16.mxu0 0
    %130 = vmatpush1.bf16.msra.mxu0 0
    %131 = vmatprep.subr.bf16.mxu0 0
    %132 = vmatpush1.bf16.msra.mxu0 0
    %133 = vmatprep.subr.bf16.mxu0 0
    %134 = vmatpush1.bf16.msra.mxu0 0
    %135 = vmatprep.mubr.bf16.mxu0 0
    %136 = vmatmul.mubr.bf16.gmra.mrb[0].mxu0 %v31
    %v137 = vpop.f32.mrb[0].mxu0
    %v138 = vadd.f32 %v53, %v137
    %v139 = vpop.f32.mrb[0].mxu0
    %v140 = vpop.f32.mrb[0].mxu0
    %v141 = vadd.f32 %v53, %v140
    %v142 = vpop.f32.mrb[0].mxu0
    %143 = vdwg.mxu0
    %v144 = vmul.f32 %v138, 0.5
    %v145 = vmul.f32 %v141, 0.5
    %v146 = vtanh.pop %v144
    %v147 = vtanh.pop %v145
    %v148 = vmul.f32 %v146, 0.5
    %v149 = vmul.f32 %v147, 0.5
    %v150 = vadd.f32 %v148, 0.5
    %v151 = vadd.f32 %v149, 0.5
    %v152 = vpack.c.bf16 %v151, %v150
    %s153 = scalar_lea.vmem [#allocation2], 64
    %v154 = vld [vmem:[%s153] sm:$0xf]
    %v155 = vld [vmem:[%s153 + $0x4] sm:$0xf]
    %v156 = vld [vmem:[%s153 + $0x8] sm:$0xf]
    %v157 = vld [vmem:[%s153 + $0xc] sm:$0xf]
    %v158 = vld [vmem:[%s153 + $0x10] sm:$0xf]
    %v159 = vld [vmem:[%s153 + $0x14] sm:$0xf]
    %v160 = vld [vmem:[%s153 + $0x18] sm:$0xf]
    %v161 = vld [vmem:[%s153 + $0x1c] sm:$0xf]
    %v162 = vld [vmem:[%s153 + $0x20] sm:$0xf]
    %v163 = vld [vmem:[%s153 + $0x24] sm:$0xf]
    %v164 = vld [vmem:[%s153 + $0x28] sm:$0xf]
    %v165 = vld [vmem:[%s153 + $0x2c] sm:$0xf]
    %v166 = vld [vmem:[%s153 + $0x30] sm:$0xf]
    %v167 = vld [vmem:[%s153 + $0x34] sm:$0xf]
    %v168 = vld [vmem:[%s153 + $0x38] sm:$0xf]
    %v169 = vld [vmem:[%s153 + $0x3c] sm:$0xf]
    %s170 = scalar_lea.vmem %s2, 1
    %v171 = vld [vmem:[%s170] sm:$0x1]
    %v173 = vlaneseq
    %v174 = vshrl.u32 %v173, 7
    %v175 = vsub.s32 0, %v174
    %v176 = vrot.slane %v171, %v175
    %v194 = vunpack.c.l.b16 %v154
    %v195 = vunpack.c.l.b16 %v155
    %v196 = vunpack.c.l.b16 %v156
    %v197 = vunpack.c.l.b16 %v157
    %v198 = vunpack.c.l.b16 %v158
    %v199 = vunpack.c.l.b16 %v159
    %v200 = vunpack.c.l.b16 %v160
    %v201 = vunpack.c.l.b16 %v161
    %v202 = vunpack.c.l.b16 %v162
    %v203 = vunpack.c.l.b16 %v163
    %v204 = vunpack.c.l.b16 %v164
    %v205 = vunpack.c.l.b16 %v165
    %v206 = vunpack.c.l.b16 %v166
    %v207 = vunpack.c.l.b16 %v167
    %v208 = vunpack.c.l.b16 %v168
    %v209 = vunpack.c.l.b16 %v169
    %v210 = vpack.c.b16 %v195, %v194
    %v211 = vpack.c.b16 %v197, %v196
    %v212 = vpack.c.b16 %v199, %v198
    %v213 = vpack.c.b16 %v201, %v200
    %v214 = vpack.c.b16 %v203, %v202
    %v215 = vpack.c.b16 %v205, %v204
    %v216 = vpack.c.b16 %v207, %v206
    %v217 = vpack.c.b16 %v209, %v208
    %226 = vmatprep.subr.bf16.mxu0 0
    %227 = vmatpush1.bf16.msra.mxu0 %v210
    %228 = vmatprep.subr.bf16.mxu0 0
    %229 = vmatpush1.bf16.msra.mxu0 %v211
    %230 = vmatprep.subr.bf16.mxu0 0
    %231 = vmatpush1.bf16.msra.mxu0 %v212
    %232 = vmatprep.subr.bf16.mxu0 0
    %233 = vmatpush1.bf16.msra.mxu0 %v213
    %234 = vmatprep.subr.bf16.mxu0 0
    %235 = vmatpush1.bf16.msra.mxu0 %v214
    %236 = vmatprep.subr.bf16.mxu0 0
    %237 = vmatpush1.bf16.msra.mxu0 %v215
    %238 = vmatprep.subr.bf16.mxu0 0
    %239 = vmatpush1.bf16.msra.mxu0 %v216
    %240 = vmatprep.subr.bf16.mxu0 0
    %241 = vmatpush1.bf16.msra.mxu0 %v217
    %242 = vmatprep.subr.bf16.mxu0 0
    %243 = vmatpush1.bf16.msra.mxu0 0
    %244 = vmatprep.subr.bf16.mxu0 0
    %245 = vmatpush1.bf16.msra.mxu0 0
    %246 = vmatprep.subr.bf16.mxu0 0
    %247 = vmatpush1.bf16.msra.mxu0 0
    %248 = vmatprep.subr.bf16.mxu0 0
    %249 = vmatpush1.bf16.msra.mxu0 0
    %250 = vmatprep.subr.bf16.mxu0 0
    %251 = vmatpush1.bf16.msra.mxu0 0
    %252 = vmatprep.subr.bf16.mxu0 0
    %253 = vmatpush1.bf16.msra.mxu0 0
    %254 = vmatprep.subr.bf16.mxu0 0
    %255 = vmatpush1.bf16.msra.mxu0 0
    %256 = vmatprep.subr.bf16.mxu0 0
    %257 = vmatpush1.bf16.msra.mxu0 0
    %258 = vmatprep.mubr.bf16.mxu0 0
    %259 = vmatmul.mubr.bf16.gmra.mrb[0].mxu0 %v152
    %v260 = vpop.f32.mrb[0].mxu0
    %v261 = vadd.f32 %v176, %v260
    %v262 = vpop.f32.mrb[0].mxu0
    %v263 = vpop.f32.mrb[0].mxu0
    %v264 = vadd.f32 %v176, %v263
    %v265 = vpop.f32.mrb[0].mxu0
    %266 = vdwg.mxu0
    %v267 = vmul.f32 %v261, 0.5
    %v268 = vmul.f32 %v264, 0.5
    %v269 = vtanh.pop %v267
    %v270 = vtanh.pop %v268
    %v271 = vmul.f32 %v269, 0.5
    %v272 = vmul.f32 %v270, 0.5
    %v273 = vadd.f32 %v271, 0.5
    %v274 = vadd.f32 %v272, 0.5
    %v275 = vpack.c.bf16 %v274, %v273
    %s276 = scalar_lea.vmem [#allocation2], 128
    %v277 = vld [vmem:[%s276] sm:$0xf]
    %v278 = vld [vmem:[%s276 + $0x4] sm:$0xf]
    %v279 = vld [vmem:[%s276 + $0x8] sm:$0xf]
    %v280 = vld [vmem:[%s276 + $0xc] sm:$0xf]
    %v281 = vld [vmem:[%s276 + $0x10] sm:$0xf]
    %v282 = vld [vmem:[%s276 + $0x14] sm:$0xf]
    %v283 = vld [vmem:[%s276 + $0x18] sm:$0xf]
    %v284 = vld [vmem:[%s276 + $0x1c] sm:$0xf]
    %v285 = vld [vmem:[%s276 + $0x20] sm:$0xf]
    %v286 = vld [vmem:[%s276 + $0x24] sm:$0xf]
    %v287 = vld [vmem:[%s276 + $0x28] sm:$0xf]
    %v288 = vld [vmem:[%s276 + $0x2c] sm:$0xf]
    %v289 = vld [vmem:[%s276 + $0x30] sm:$0xf]
    %v290 = vld [vmem:[%s276 + $0x34] sm:$0xf]
    %v291 = vld [vmem:[%s276 + $0x38] sm:$0xf]
    %v292 = vld [vmem:[%s276 + $0x3c] sm:$0xf]
    %s293 = scalar_lea.vmem %s2, 2
    %v294 = vld [vmem:[%s293] sm:$0x1]
    %v296 = vlaneseq
    %v297 = vshrl.u32 %v296, 7
    %v298 = vsub.s32 0, %v297
    %v299 = vrot.slane %v294, %v298
    %v317 = vunpack.c.l.b16 %v277
    %v318 = vunpack.c.l.b16 %v278
    %v319 = vunpack.c.l.b16 %v279
    %v320 = vunpack.c.l.b16 %v280
    %v321 = vunpack.c.l.b16 %v281
    %v322 = vunpack.c.l.b16 %v282
    %v323 = vunpack.c.l.b16 %v283
    %v324 = vunpack.c.l.b16 %v284
    %v325 = vunpack.c.l.b16 %v285
    %v326 = vunpack.c.l.b16 %v286
    %v327 = vunpack.c.l.b16 %v287
    %v328 = vunpack.c.l.b16 %v288
    %v329 = vunpack.c.l.b16 %v289
    %v330 = vunpack.c.l.b16 %v290
    %v331 = vunpack.c.l.b16 %v291
    %v332 = vunpack.c.l.b16 %v292
    %v333 = vpack.c.b16 %v318, %v317
    %v334 = vpack.c.b16 %v320, %v319
    %v335 = vpack.c.b16 %v322, %v321
    %v336 = vpack.c.b16 %v324, %v323
    %v337 = vpack.c.b16 %v326, %v325
    %v338 = vpack.c.b16 %v328, %v327
    %v339 = vpack.c.b16 %v330, %v329
    %v340 = vpack.c.b16 %v332, %v331
    %349 = vmatprep.subr.bf16.mxu0 0
    %350 = vmatpush1.bf16.msra.mxu0 %v333
    %351 = vmatprep.subr.bf16.mxu0 0
    %352 = vmatpush1.bf16.msra.mxu0 %v334
    %353 = vmatprep.subr.bf16.mxu0 0
    %354 = vmatpush1.bf16.msra.mxu0 %v335
    %355 = vmatprep.subr.bf16.mxu0 0
    %356 = vmatpush1.bf16.msra.mxu0 %v336
    %357 = vmatprep.subr.bf16.mxu0 0
    %358 = vmatpush1.bf16.msra.mxu0 %v337
    %359 = vmatprep.subr.bf16.mxu0 0
    %360 = vmatpush1.bf16.msra.mxu0 %v338
    %361 = vmatprep.subr.bf16.mxu0 0
    %362 = vmatpush1.bf16.msra.mxu0 %v339
    %363 = vmatprep.subr.bf16.mxu0 0
    %364 = vmatpush1.bf16.msra.mxu0 %v340
    %365 = vmatprep.subr.bf16.mxu0 0
    %366 = vmatpush1.bf16.msra.mxu0 0
    %367 = vmatprep.subr.bf16.mxu0 0
    %368 = vmatpush1.bf16.msra.mxu0 0
    %369 = vmatprep.subr.bf16.mxu0 0
    %370 = vmatpush1.bf16.msra.mxu0 0
    %371 = vmatprep.subr.bf16.mxu0 0
    %372 = vmatpush1.bf16.msra.mxu0 0
    %373 = vmatprep.subr.bf16.mxu0 0
    %374 = vmatpush1.bf16.msra.mxu0 0
    %375 = vmatprep.subr.bf16.mxu0 0
    %376 = vmatpush1.bf16.msra.mxu0 0
    %377 = vmatprep.subr.bf16.mxu0 0
    %378 = vmatpush1.bf16.msra.mxu0 0
    %379 = vmatprep.subr.bf16.mxu0 0
    %380 = vmatpush1.bf16.msra.mxu0 0
    %381 = vmatprep.mubr.bf16.mxu0 0
    %382 = vmatmul.mubr.bf16.gmra.mrb[0].mxu0 %v275
    %v383 = vpop.f32.mrb[0].mxu0
    %v384 = vadd.f32 %v299, %v383
    %v385 = vpop.f32.mrb[0].mxu0
    %v386 = vpop.f32.mrb[0].mxu0
    %v387 = vadd.f32 %v299, %v386
    %v388 = vpop.f32.mrb[0].mxu0
    %389 = vdwg.mxu0
    %v390 = vmul.f32 %v384, 0.5
    %v391 = vmul.f32 %v387, 0.5
    %v392 = vtanh.pop %v390
    %v393 = vtanh.pop %v391
    %v394 = vmul.f32 %v392, 0.5
    %v395 = vmul.f32 %v393, 0.5
    %v396 = vadd.f32 %v394, 0.5
    %v397 = vadd.f32 %v395, 0.5
    %v398 = vpack.c.bf16 %v397, %v396
    %s399 = scalar_lea.vmem [#allocation2], 192
    %v400 = vld [vmem:[%s399] sm:$0xf]
    %v401 = vld [vmem:[%s399 + $0x4] sm:$0xf]
    %v402 = vld [vmem:[%s399 + $0x8] sm:$0xf]
    %v403 = vld [vmem:[%s399 + $0xc] sm:$0xf]
    %v404 = vld [vmem:[%s399 + $0x10] sm:$0xf]
    %v405 = vld [vmem:[%s399 + $0x14] sm:$0xf]
    %v406 = vld [vmem:[%s399 + $0x18] sm:$0xf]
    %v407 = vld [vmem:[%s399 + $0x1c] sm:$0xf]
    %v408 = vld [vmem:[%s399 + $0x20] sm:$0xf]
    %v409 = vld [vmem:[%s399 + $0x24] sm:$0xf]
    %v410 = vld [vmem:[%s399 + $0x28] sm:$0xf]
    %v411 = vld [vmem:[%s399 + $0x2c] sm:$0xf]
    %v412 = vld [vmem:[%s399 + $0x30] sm:$0xf]
    %v413 = vld [vmem:[%s399 + $0x34] sm:$0xf]
    %v414 = vld [vmem:[%s399 + $0x38] sm:$0xf]
    %v415 = vld [vmem:[%s399 + $0x3c] sm:$0xf]
    %s416 = scalar_lea.vmem %s2, 3
    %v417 = vld [vmem:[%s416] sm:$0x1]
    %v419 = vlaneseq
    %v420 = vshrl.u32 %v419, 7
    %v421 = vsub.s32 0, %v420
    %v422 = vrot.slane %v417, %v421
    %v440 = vunpack.c.l.b16 %v400
    %v441 = vunpack.c.l.b16 %v401
    %v442 = vunpack.c.l.b16 %v402
    %v443 = vunpack.c.l.b16 %v403
    %v444 = vunpack.c.l.b16 %v404
    %v445 = vunpack.c.l.b16 %v405
    %v446 = vunpack.c.l.b16 %v406
    %v447 = vunpack.c.l.b16 %v407
    %v448 = vunpack.c.l.b16 %v408
    %v449 = vunpack.c.l.b16 %v409
    %v450 = vunpack.c.l.b16 %v410
    %v451 = vunpack.c.l.b16 %v411
    %v452 = vunpack.c.l.b16 %v412
    %v453 = vunpack.c.l.b16 %v413
    %v454 = vunpack.c.l.b16 %v414
    %v455 = vunpack.c.l.b16 %v415
    %v456 = vpack.c.b16 %v441, %v440
    %v457 = vpack.c.b16 %v443, %v442
    %v458 = vpack.c.b16 %v445, %v444
    %v459 = vpack.c.b16 %v447, %v446
    %v460 = vpack.c.b16 %v449, %v448
    %v461 = vpack.c.b16 %v451, %v450
    %v462 = vpack.c.b16 %v453, %v452
    %v463 = vpack.c.b16 %v455, %v454
    %472 = vmatprep.subr.bf16.mxu0 0
    %473 = vmatpush1.bf16.msra.mxu0 %v456
    %474 = vmatprep.subr.bf16.mxu0 0
    %475 = vmatpush1.bf16.msra.mxu0 %v457
    %476 = vmatprep.subr.bf16.mxu0 0
    %477 = vmatpush1.bf16.msra.mxu0 %v458
    %478 = vmatprep.subr.bf16.mxu0 0
    %479 = vmatpush1.bf16.msra.mxu0 %v459
    %480 = vmatprep.subr.bf16.mxu0 0
    %481 = vmatpush1.bf16.msra.mxu0 %v460
    %482 = vmatprep.subr.bf16.mxu0 0
    %483 = vmatpush1.bf16.msra.mxu0 %v461
    %484 = vmatprep.subr.bf16.mxu0 0
    %485 = vmatpush1.bf16.msra.mxu0 %v462
    %486 = vmatprep.subr.bf16.mxu0 0
    %487 = vmatpush1.bf16.msra.mxu0 %v463
    %488 = vmatprep.subr.bf16.mxu0 0
    %489 = vmatpush1.bf16.msra.mxu0 0
    %490 = vmatprep.subr.bf16.mxu0 0
    %491 = vmatpush1.bf16.msra.mxu0 0
    %492 = vmatprep.subr.bf16.mxu0 0
    %493 = vmatpush1.bf16.msra.mxu0 0
    %494 = vmatprep.subr.bf16.mxu0 0
    %495 = vmatpush1.bf16.msra.mxu0 0
    %496 = vmatprep.subr.bf16.mxu0 0
    %497 = vmatpush1.bf16.msra.mxu0 0
    %498 = vmatprep.subr.bf16.mxu0 0
    %499 = vmatpush1.bf16.msra.mxu0 0
    %500 = vmatprep.subr.bf16.mxu0 0
    %501 = vmatpush1.bf16.msra.mxu0 0
    %502 = vmatprep.subr.bf16.mxu0 0
    %503 = vmatpush1.bf16.msra.mxu0 0
    %504 = vmatprep.mubr.bf16.mxu0 0
    %505 = vmatmul.mubr.bf16.gmra.mrb[0].mxu0 %v398
    %v506 = vpop.f32.mrb[0].mxu0
    %v507 = vadd.f32 %v422, %v506
    %v508 = vpop.f32.mrb[0].mxu0
    %v509 = vpop.f32.mrb[0].mxu0
    %v510 = vadd.f32 %v422, %v509
    %v511 = vpop.f32.mrb[0].mxu0
    %512 = vdwg.mxu0
    %v513 = vmul.f32 %v507, 0.5
    %v514 = vmul.f32 %v510, 0.5
    %v515 = vtanh.pop %v513
    %v516 = vtanh.pop %v514
    %v517 = vmul.f32 %v515, 0.5
    %v518 = vmul.f32 %v516, 0.5
    %v519 = vadd.f32 %v517, 0.5
    %v520 = vadd.f32 %v518, 0.5
    %v521 = vpack.c.bf16 %v520, %v519
    %s522 = scalar_lea.vmem [#allocation2], 256
    %v523 = vld [vmem:[%s522] sm:$0xf]
    %v524 = vld [vmem:[%s522 + $0x4] sm:$0xf]
    %v525 = vld [vmem:[%s522 + $0x8] sm:$0xf]
    %v526 = vld [vmem:[%s522 + $0xc] sm:$0xf]
    %v527 = vld [vmem:[%s522 + $0x10] sm:$0xf]
    %v528 = vld [vmem:[%s522 + $0x14] sm:$0xf]
    %v529 = vld [vmem:[%s522 + $0x18] sm:$0xf]
    %v530 = vld [vmem:[%s522 + $0x1c] sm:$0xf]
    %v531 = vld [vmem:[%s522 + $0x20] sm:$0xf]
    %v532 = vld [vmem:[%s522 + $0x24] sm:$0xf]
    %v533 = vld [vmem:[%s522 + $0x28] sm:$0xf]
    %v534 = vld [vmem:[%s522 + $0x2c] sm:$0xf]
    %v535 = vld [vmem:[%s522 + $0x30] sm:$0xf]
    %v536 = vld [vmem:[%s522 + $0x34] sm:$0xf]
    %v537 = vld [vmem:[%s522 + $0x38] sm:$0xf]
    %v538 = vld [vmem:[%s522 + $0x3c] sm:$0xf]
    %s539 = scalar_lea.vmem %s2, 4
    %v540 = vld [vmem:[%s539] sm:$0x1]
    %v542 = vlaneseq
    %v543 = vshrl.u32 %v542, 7
    %v544 = vsub.s32 0, %v543
    %v545 = vrot.slane %v540, %v544
    %v563 = vunpack.c.l.b16 %v523
    %v564 = vunpack.c.l.b16 %v524
    %v565 = vunpack.c.l.b16 %v525
    %v566 = vunpack.c.l.b16 %v526
    %v567 = vunpack.c.l.b16 %v527
    %v568 = vunpack.c.l.b16 %v528
    %v569 = vunpack.c.l.b16 %v529
    %v570 = vunpack.c.l.b16 %v530
    %v571 = vunpack.c.l.b16 %v531
    %v572 = vunpack.c.l.b16 %v532
    %v573 = vunpack.c.l.b16 %v533
    %v574 = vunpack.c.l.b16 %v534
    %v575 = vunpack.c.l.b16 %v535
    %v576 = vunpack.c.l.b16 %v536
    %v577 = vunpack.c.l.b16 %v537
    %v578 = vunpack.c.l.b16 %v538
    %v579 = vpack.c.b16 %v564, %v563
    %v580 = vpack.c.b16 %v566, %v565
    %v581 = vpack.c.b16 %v568, %v567
    %v582 = vpack.c.b16 %v570, %v569
    %v583 = vpack.c.b16 %v572, %v571
    %v584 = vpack.c.b16 %v574, %v573
    %v585 = vpack.c.b16 %v576, %v575
    %v586 = vpack.c.b16 %v578, %v577
    %595 = vmatprep.subr.bf16.mxu0 0
    %596 = vmatpush1.bf16.msra.mxu0 %v579
    %597 = vmatprep.subr.bf16.mxu0 0
    %598 = vmatpush1.bf16.msra.mxu0 %v580
    %599 = vmatprep.subr.bf16.mxu0 0
    %600 = vmatpush1.bf16.msra.mxu0 %v581
    %601 = vmatprep.subr.bf16.mxu0 0
    %602 = vmatpush1.bf16.msra.mxu0 %v582
    %603 = vmatprep.subr.bf16.mxu0 0
    %604 = vmatpush1.bf16.msra.mxu0 %v583
    %605 = vmatprep.subr.bf16.mxu0 0
    %606 = vmatpush1.bf16.msra.mxu0 %v584
    %607 = vmatprep.subr.bf16.mxu0 0
    %608 = vmatpush1.bf16.msra.mxu0 %v585
    %609 = vmatprep.subr.bf16.mxu0 0
    %610 = vmatpush1.bf16.msra.mxu0 %v586
    %611 = vmatprep.subr.bf16.mxu0 0
    %612 = vmatpush1.bf16.msra.mxu0 0
    %613 = vmatprep.subr.bf16.mxu0 0
    %614 = vmatpush1.bf16.msra.mxu0 0
    %615 = vmatprep.subr.bf16.mxu0 0
    %616 = vmatpush1.bf16.msra.mxu0 0
    %617 = vmatprep.subr.bf16.mxu0 0
    %618 = vmatpush1.bf16.msra.mxu0 0
    %619 = vmatprep.subr.bf16.mxu0 0
    %620 = vmatpush1.bf16.msra.mxu0 0
    %621 = vmatprep.subr.bf16.mxu0 0
    %622 = vmatpush1.bf16.msra.mxu0 0
    %623 = vmatprep.subr.bf16.mxu0 0
    %624 = vmatpush1.bf16.msra.mxu0 0
    %625 = vmatprep.subr.bf16.mxu0 0
    %626 = vmatpush1.bf16.msra.mxu0 0
    %627 = vmatprep.mubr.bf16.mxu0 0
    %628 = vmatmul.mubr.bf16.gmra.mrb[0].mxu0 %v521
    %v629 = vpop.f32.mrb[0].mxu0
    %v630 = vadd.f32 %v545, %v629
    %v631 = vpop.f32.mrb[0].mxu0
    %v632 = vpop.f32.mrb[0].mxu0
    %v633 = vadd.f32 %v545, %v632
    %v634 = vpop.f32.mrb[0].mxu0
    %635 = vdwg.mxu0
    %v636 = vmul.f32 %v630, 0.5
    %v637 = vmul.f32 %v633, 0.5
    %v638 = vtanh.pop %v636
    %v639 = vtanh.pop %v637
    %v640 = vmul.f32 %v638, 0.5
    %v641 = vmul.f32 %v639, 0.5
    %v642 = vadd.f32 %v640, 0.5
    %v643 = vadd.f32 %v641, 0.5
    %644 = vst [vmem:[%s3] sm:$0xff] %v642
    %645 = vst [vmem:[%s3 + $0x8] sm:$0xff] %v643
    // Predicated region
    $region18: #{amldnn_symmetric_forward.1} parent=1 // pred_check
      _
    $region19: #{amldnn_symmetric_forward.1} parent=1 // pred_check_branch
      %647 = sbr.rel (0) target = $region21
    $region20: #{amldnn_symmetric_forward.1} parent=1 // pred_region
      _
    $region21: #{amldnn_symmetric_forward.1} parent=1 // pred_fallthru
      _
    // Predicated region
    $region22: #{amldnn_symmetric_forward.1} parent=1 // pred_check
      _
    $region23: #{amldnn_symmetric_forward.1} parent=1 // pred_check_branch
      %649 = sbr.rel (0) target = $region25
    $region24: #{amldnn_symmetric_forward.1} parent=1 // pred_region
      _
    $region25: #{amldnn_symmetric_forward.1} parent=1 // pred_fallthru
      _
    %650 = vsyncpa [#allocation3], 1

</llo_original>
